<compile_context>
chip_gen: v7x
topology: tpu7x:2x2x1
jax: 0.10.0
libtpu: 0.0.40
codegen_flags: <defaults>
</compile_context>

<pallas_src>
import functools
from typing import NamedTuple

import jax
import jax.numpy as jnp
from jax.experimental import pallas as pl
from jax.experimental.pallas import tpu as pltpu


def _round_up(x: int, m: int) -> int:
    return ((x + m - 1) // m) * m


def _ceil_div(a: int, b: int) -> int:
    return -(-a // b)


# ---------------------------------------------------------------------------
# Kernels
# ---------------------------------------------------------------------------
def _linear_kernel(x_ref, w_ref, b_ref, o_ref, acc_ref):
    """One (tm, tn) output tile; K is the innermost reduction grid axis.

    x_ref:   (tm, tk)   activation tile (x dtype)
    w_ref:   (tk, tn)   pre-transposed weight tile (param dtype, e.g. bf16)
    b_ref:   (1, tn)    bias row tile (f32)
    o_ref:   (tm, tn)   output tile
    acc_ref: (tm, tn)   f32 accumulator scratch, resident across the K axis
    """
    k = pl.program_id(2)

    x_v = x_ref[...]
    w_v = w_ref[...]
    if x_v.dtype != w_v.dtype:
        # Weights are streamed narrow (bf16) from HBM; do the MXU matmul in the
        # narrow dtype with f32 accumulation (full MXU rate, halved HBM bytes).
        x_v = x_v.astype(w_v.dtype)

    partial = jnp.dot(x_v, w_v, preferred_element_type=jnp.float32)

    # Fold accumulator init + bias into the first K step (no separate zero
    # store); plain accumulate on later steps.
    @pl.when(k == 0)
    def _():
        acc_ref[...] = partial + b_ref[...].astype(jnp.float32)

    @pl.when(k > 0)
    def _():
        acc_ref[...] += partial

    # Cast + store only on the final K step.
    @pl.when(k == pl.num_programs(2) - 1)
    def _():
        o_ref[...] = acc_ref[...].astype(o_ref.dtype)


def _linear_single_block_kernel(x_ref, w_ref, b_ref, o_ref):
    """Whole problem in VMEM (tiny shapes): one dot, one store."""
    x_v = x_ref[...]
    w_v = w_ref[...]
    if x_v.dtype != w_v.dtype:
        x_v = x_v.astype(w_v.dtype)
    acc = jnp.dot(x_v, w_v, preferred_element_type=jnp.float32)
    o_ref[...] = (acc + b_ref[...].astype(jnp.float32)).astype(o_ref.dtype)


# ---------------------------------------------------------------------------
# One-time parameter preparation (amortized across forward calls)
# ---------------------------------------------------------------------------
class PreparedLinear(NamedTuple):
    weight: jax.Array      # (k_pad, n_pad), transposed + zero-padded (+ cast)
    bias: jax.Array        # (1, n_pad), f32
    num_classes: int
    voc: int
    tk: int
    tn: int


def prepare_params(weight, bias, *, param_dtype=None, tk_max=4096, tn_max=256):
    """Pad / transpose / (optionally) cast the nn.Linear params once at init.

    weight: (num_classes, voc_size)  PyTorch layout
    bias:   (num_classes,)
    param_dtype: e.g. jnp.bfloat16 to halve weight HBM traffic (f32 accumulate).
    """
    num_classes, voc = weight.shape

    # Class (N) tile: lane-dense (>=128); 256 when it divides the padded class
    # axis (fills the 256x256 MXU on v6e/v7x; 128 matches v5e's MXU).
    n_pad = _round_up(max(num_classes, 128), 128)
    tn = 256 if (tn_max >= 256 and n_pad >= 256 and n_pad % 256 == 0) else 128

    # Contraction (K) tile: balance across ceil(voc / tk_max) tiles so the pad
    # waste stays bounded while each grid step still moves a big weight slab.
    n_k = max(1, _ceil_div(voc, tk_max))
    tk = _round_up(_ceil_div(voc, n_k), 128)
    k_pad = _round_up(voc, tk)

    wt = jnp.asarray(weight).T  # (voc, num_classes): standard (m,k)x(k,n) dot
    if param_dtype is not None:
        wt = wt.astype(param_dtype)
    wp = jnp.pad(wt, ((0, k_pad - voc), (0, n_pad - num_classes)))

    bp = jnp.pad(jnp.asarray(bias, jnp.float32),
                 (0, n_pad - num_classes)).reshape(1, n_pad)

    return PreparedLinear(weight=wp, bias=bp, num_classes=num_classes,
                          voc=voc, tk=tk, tn=tn)


# ---------------------------------------------------------------------------
# Forward
# ---------------------------------------------------------------------------
@functools.partial(jax.jit,
                   static_argnames=("num_classes", "voc", "tk", "tn", "tm_max"))
def _forward_impl(x, wp, bp, *, num_classes, voc, tk, tn, tm_max):
    B, voc_x = x.shape
    assert voc_x == voc, "x feature dim must match Linear in_features"
    k_pad, n_pad = wp.shape
    n_blocks = n_pad // tn

    # Batch (M) tile: balance across ceil(B / tm_max) tiles (pad waste <= 1
    # sublane row), multiple of 8 sublanes.
    n_m_tiles = max(1, _ceil_div(B, tm_max))
    tm = _round_up(_ceil_div(B, n_m_tiles), 8)
    m_blocks = _round_up(B, tm) // tm

    # v7x megacore: if both "parallel" axes would have extent 1, split M so the
    # second TensorCore gets work (no-op on single-TC v5e/v6e).
    if n_blocks == 1 and m_blocks == 1 and B >= 16:
        tm = _round_up(_ceil_div(B, 2), 8)
    m_pad = _round_up(B, tm)

    # Zero-pad x (zeros are inert in the reduction); weight/bias are pre-padded.
    xp = x
    if m_pad != B or k_pad != voc:
        xp = jnp.pad(x, ((0, m_pad - B), (0, k_pad - voc)))

    grid = (m_pad // tm, n_blocks, k_pad // tk)

    if grid == (1, 1, 1):
        # Tiny problem: single unblocked call, whole operands in VMEM.
        out = pl.pallas_call(
            _linear_single_block_kernel,
            out_shape=jax.ShapeDtypeStruct((m_pad, n_pad), x.dtype),
        )(xp, wp, bp)
    else:
        out = pl.pallas_call(
            _linear_kernel,
            out_shape=jax.ShapeDtypeStruct((m_pad, n_pad), x.dtype),
            grid_spec=pl.GridSpec(
                grid=grid,
                in_specs=[
                    pl.BlockSpec((tm, tk), lambda i, j, k: (i, k)),   # x
                    pl.BlockSpec((tk, tn), lambda i, j, k: (k, j)),   # weight^T
                    pl.BlockSpec((1, tn), lambda i, j, k: (0, j)),    # bias row
                ],
                out_specs=pl.BlockSpec((tm, tn), lambda i, j, k: (i, j)),
                scratch_shapes=[pltpu.VMEM((tm, tn), jnp.float32)],
            ),
            compiler_params=pltpu.CompilerParams(
                dimension_semantics=("parallel", "parallel", "arbitrary"),
                # Enlarged tiles need > v5e's 16 MiB default scoped VMEM; stay
                # well under v7x's 64 MiB physical.
                vmem_limit_bytes=48 * 1024 * 1024,
            ),
        )(xp, wp, bp)

    # Slice away padding (lane-dense compute, exact-size result).
    return out[:B, :num_classes]


def nn_classifier_forward(x, params: PreparedLinear, *, tm_max=256):
    """y = x @ weight.T + bias  (PyTorch nn.Linear semantics)."""
    return _forward_impl(x, params.weight, params.bias,
                         num_classes=params.num_classes, voc=params.voc,
                         tk=params.tk, tn=params.tn, tm_max=tm_max)


# ---------------------------------------------------------------------------
if __name__ == "__main__":
    key = jax.random.PRNGKey(0)

    # ---- Test 1: small shape consistent with the module (fast path) --------
    B, VOC, NC = 8, 128, 16
    k1, k2, k3, key = jax.random.split(key, 4)
    bound = 1.0 / jnp.sqrt(jnp.float32(VOC))
    w1 = jax.random.uniform(k1, (NC, VOC), jnp.float32, minval=-bound, maxval=bound)
    b1 = jax.random.uniform(k2, (NC,), jnp.float32, minval=-bound, maxval=bound)
    x1 = jax.random.normal(k3, (B, VOC), jnp.float32)

    p1 = prepare_params(w1, b1)                     # exact f32 params
    y1 = nn_classifier_forward(x1, p1)
    jax.block_until_ready(y1)
    ref1 = x1 @ w1.T + b1
    assert y1.shape == (B, NC)
    assert jnp.allclose(y1, ref1, atol=1e-4, rtol=1e-4), float(
        jnp.max(jnp.abs(y1 - ref1)))

    # ---- Test 2: larger vocab / classes (tiled path, bf16 weight stream) ---
    B2, VOC2, NC2 = 40, 5120, 512
    k1, k2, k3, key = jax.random.split(key, 4)
    bound2 = 1.0 / jnp.sqrt(jnp.float32(VOC2))
    w2 = jax.random.uniform(k1, (NC2, VOC2), jnp.float32, minval=-bound2, maxval=bound2)
    b2 = jax.random.uniform(k2, (NC2,), jnp.float32, minval=-bound2, maxval=bound2)
    x2 = jax.random.normal(k3, (B2, VOC2), jnp.float32)

    p2 = prepare_params(w2, b2, param_dtype=jnp.bfloat16)   # one-time prep
    y2 = nn_classifier_forward(x2, p2)
    jax.block_until_ready(y2)
    # Reference built from the same bf16-rounded operands (f32 accumulation).
    x2b = x2.astype(jnp.bfloat16).astype(jnp.float32)
    w2b = w2.astype(jnp.bfloat16).astype(jnp.float32)
    ref2 = x2b @ w2b.T + b2
    assert y2.shape == (B2, NC2)
    assert jnp.allclose(y2, ref2, atol=1e-2, rtol=1e-2), float(
        jnp.max(jnp.abs(y2 - ref2)))

    print("KERNEL_OK")
</pallas_src>

<mosaic_0001>
module attributes {stable_mosaic.version = 11 : i64} {
  func.func @_linear_single_block_kernel(%arg0: memref<8x128xf32, #tpu.memory_space<vmem>>, %arg1: memref<128x128xf32, #tpu.memory_space<vmem>>, %arg2: memref<1x128xf32, #tpu.memory_space<vmem>>, %arg3: memref<8x128xf32, #tpu.memory_space<vmem>>) attributes {dimension_semantics = [], scalar_prefetch = 0 : i64, scratch_operands = 0 : i64, tpu.core_type = #tpu.core_type<tc>} {
    %c0 = arith.constant 0 : index
    %c0_0 = arith.constant 0 : index
    %0 = vector.load %arg0[%c0, %c0_0] : memref<8x128xf32, #tpu.memory_space<vmem>>, vector<8x128xf32>
    %c0_1 = arith.constant 0 : index
    %c0_2 = arith.constant 0 : index
    %1 = vector.load %arg1[%c0_1, %c0_2] : memref<128x128xf32, #tpu.memory_space<vmem>>, vector<128x128xf32>
    %cst = arith.constant dense<0.000000e+00> : vector<8x128xf32>
    %2 = tpu.matmul %0, %1, %cst {dimension_numbers = #tpu.dot_dimension_numbers<[1], [0], [0], [1], [0, 0, 1, 1], [], []>} : vector<8x128xf32>, vector<128x128xf32>, vector<8x128xf32> -> vector<8x128xf32>
    %c0_3 = arith.constant 0 : index
    %c0_4 = arith.constant 0 : index
    %3 = vector.load %arg2[%c0_3, %c0_4] : memref<1x128xf32, #tpu.memory_space<vmem>>, vector<1x128xf32>
    %4 = vector.broadcast %3 : vector<1x128xf32> to vector<8x128xf32>
    %5 = arith.addf %2, %4 : vector<8x128xf32>
    %c0_5 = arith.constant 0 : index
    %c0_6 = arith.constant 0 : index
    %6 = vector.load %arg3[%c0_5, %c0_6] : memref<8x128xf32, #tpu.memory_space<vmem>>, vector<8x128xf32>
    tpu.vector_store %arg3[%c0_5, %c0_6], %5 {strides = array<i32>} : memref<8x128xf32, #tpu.memory_space<vmem>>, vector<8x128xf32>,
    return
  }
}

</mosaic_0001>

<llo_original>
// kernel: _forward_impl.1
$region0: #{_forward_impl.1}
  #allocation0 [shape = 'u32[]', space=smem, size = 0x4, offset = 0x4, fixed_abs, tag = 'smem constant byte address 0x4 - core index']
  #allocation1 [shape = 'u32[144,128]{1,0:T(1,128)}', space=vmem, size = 0x12000, scoped, tag = 'internal scratch']
  %s0 = inlined_call_operand.hbm [shape: f32[8,128], index: 0, kind: input, shape index: {}]
  %s1 = inlined_call_operand.hbm [shape: f32[128,128], index: 1, kind: input, shape index: {}]
  %s2 = inlined_call_operand.vmem [shape: f32[1,128], index: 2, kind: input, shape index: {}]
  %s3 = inlined_call_operand.hbm [shape: f32[8,128], index: 3, kind: output, shape index: {}]
  %s4 = sld [smem:[#allocation0]]
  $region30: #{_forward_impl.1} parent=0
    _
  %s6 = ssub.s32 1, %s4
  %s7 = scalar_select 0, %s6, %s4
  $region1: #{_forward_impl.1} parent=0
    #allocation2 [shape = 'u8[4096]{0}', space=vmem, size = 0x1000, scoped, tag = 'input window, operand 0, single buffered']
    #allocation3 [shape = 's32[1]{0}', space=sflag, size = 0x4, scoped, tag = 'scoped memory for _forward_impl.1']
    #allocation4 [shape = 's32[1]{0}', space=sflag, size = 0x4, scoped, tag = 'scoped memory for _forward_impl.1']
    #allocation5 [shape = 'u8[65536]{0}', space=vmem, size = 0x10000, scoped, tag = 'input window, operand 1, single buffered']
    #allocation6 [shape = 's32[1]{0}', space=sflag, size = 0x4, scoped, tag = 'scoped memory for _forward_impl.1']
    #allocation7 [shape = 'u8[4096]{0}', space=vmem, size = 0x1000, scoped, tag = 'output window, operand 0, single buffered']
    %8 = vsyncpa [#allocation3], 0
    %9 = vsyncpa [#allocation6], 0
    %10 = vsyncpa [#allocation4], 0
    // Predicated region
    $region2: #{_forward_impl.1} parent=1 // pred_check
      _
    $region3: #{_forward_impl.1} parent=1 // pred_check_branch
      %12 = sbr.rel (0) target = $region5
    $region4: #{_forward_impl.1} parent=1 // pred_region
      %s14 = ssub.s32 128, 128
      %15 = vsyncadd [#allocation3], %s14
      %s17 = sshll.u32 [#allocation2], 4
      %s18 = int_to_ptr.vmem [resolvable:$true] %s17
      %20 = dma.hbm_to_vmem [thread:$0]  %s0, 128, %s18, [#allocation3]
    $region5: #{_forward_impl.1} parent=1 // pred_fallthru
      _
    // Predicated region
    $region6: #{_forward_impl.1} parent=1 // pred_check
      _
    $region7: #{_forward_impl.1} parent=1 // pred_check_branch
      %22 = sbr.rel (0) target = $region9
    $region8: #{_forward_impl.1} parent=1 // pred_region
      %s24 = ssub.s32 2048, 2048
      %25 = vsyncadd [#allocation6], %s24
      %s26 = sshll.u32 [#allocation5], 4
      %s27 = int_to_ptr.vmem [resolvable:$true] %s26
      %32 = dma.hbm_to_vmem [thread:$0]  %s1, 2048, %s27, [#allocation6], 128, 128, 8
    $region9: #{_forward_impl.1} parent=1 // pred_fallthru
      _
    // Predicated region
    $region10: #{_forward_impl.1} parent=1 // pred_check
      _
    $region11: #{_forward_impl.1} parent=1 // pred_check_branch
      %34 = sbr.rel (0) target = $region13
    $region12: #{_forward_impl.1} parent=1 // pred_region
      _
    $region13: #{_forward_impl.1} parent=1 // pred_fallthru
      _
    // Predicated region
    $region14: #{_forward_impl.1} parent=1 // pred_check
      _
    $region15: #{_forward_impl.1} parent=1 // pred_check_branch
      %36 = sbr.rel (0) target = $region17
    $region16: #{_forward_impl.1} parent=1 // pred_region
      %37 = dma.done [#allocation3], 128
    $region17: #{_forward_impl.1} parent=1 // pred_fallthru
      _
    // Predicated region
    $region18: #{_forward_impl.1} parent=1 // pred_check
      _
    $region19: #{_forward_impl.1} parent=1 // pred_check_branch
      %39 = sbr.rel (0) target = $region21
    $region20: #{_forward_impl.1} parent=1 // pred_region
      %40 = dma.done [#allocation6], 2048
    $region21: #{_forward_impl.1} parent=1 // pred_fallthru
      _
    %v41 = vld [vmem:[#allocation2] sm:$0xff]
    %v42 = vld [vmem:[#allocation5] sm:$0xff]
    %v43 = vld [vmem:[#allocation5 + $0x8] sm:$0xff]
    %v44 = vld [vmem:[#allocation5 + $0x10] sm:$0xff]
    %v45 = vld [vmem:[#allocation5 + $0x18] sm:$0xff]
    %v46 = vld [vmem:[#allocation5 + $0x20] sm:$0xff]
    %v47 = vld [vmem:[#allocation5 + $0x28] sm:$0xff]
    %v48 = vld [vmem:[#allocation5 + $0x30] sm:$0xff]
    %v49 = vld [vmem:[#allocation5 + $0x38] sm:$0xff]
    %v50 = vld [vmem:[#allocation5 + $0x40] sm:$0xff]
    %v51 = vld [vmem:[#allocation5 + $0x48] sm:$0xff]
    %v52 = vld [vmem:[#allocation5 + $0x50] sm:$0xff]
    %v53 = vld [vmem:[#allocation5 + $0x58] sm:$0xff]
    %v54 = vld [vmem:[#allocation5 + $0x60] sm:$0xff]
    %v55 = vld [vmem:[#allocation5 + $0x68] sm:$0xff]
    %v56 = vld [vmem:[#allocation5 + $0x70] sm:$0xff]
    %v57 = vld [vmem:[#allocation5 + $0x78] sm:$0xff]
    %v58 = vld [vmem:[%s2] sm:$0x1]
    %v60 = vlaneseq
    %v61 = vshrl.u32 %v60, 7
    %v62 = vsub.s32 0, %v61
    %v63 = vrot.slane %v58, %v62
    %65 = vmatprep.subr.mxu0 0.0
    %66 = vmatpush1.msra.mxu0 %v42
    %67 = vmatprep.subr.mxu0 0.0
    %68 = vmatpush1.msra.mxu0 %v43
    %69 = vmatprep.subr.mxu0 0.0
    %70 = vmatpush1.msra.mxu0 %v44
    %71 = vmatprep.subr.mxu0 0.0
    %72 = vmatpush1.msra.mxu0 %v45
    %73 = vmatprep.subr.mxu0 0.0
    %74 = vmatpush1.msra.mxu0 %v46
    %75 = vmatprep.subr.mxu0 0.0
    %76 = vmatpush1.msra.mxu0 %v47
    %77 = vmatprep.subr.mxu0 0.0
    %78 = vmatpush1.msra.mxu0 %v48
    %79 = vmatprep.subr.mxu0 0.0
    %80 = vmatpush1.msra.mxu0 %v49
    %81 = vmatprep.subr.mxu0 0.0
    %82 = vmatpush1.msra.mxu0 %v50
    %83 = vmatprep.subr.mxu0 0.0
    %84 = vmatpush1.msra.mxu0 %v51
    %85 = vmatprep.subr.mxu0 0.0
    %86 = vmatpush1.msra.mxu0 %v52
    %87 = vmatprep.subr.mxu0 0.0
    %88 = vmatpush1.msra.mxu0 %v53
    %89 = vmatprep.subr.mxu0 0.0
    %90 = vmatpush1.msra.mxu0 %v54
    %91 = vmatprep.subr.mxu0 0.0
    %92 = vmatpush1.msra.mxu0 %v55
    %93 = vmatprep.subr.mxu0 0.0
    %94 = vmatpush1.msra.mxu0 %v56
    %95 = vmatprep.subr.mxu0 0.0
    %96 = vmatpush1.msra.mxu0 %v57
    %97 = vmatprep.subr.mxu0 0.0
    %98 = vmatpush1.msra.mxu0 0.0
    %99 = vmatprep.subr.mxu0 0.0
    %100 = vmatpush1.msra.mxu0 0.0
    %101 = vmatprep.subr.mxu0 0.0
    %102 = vmatpush1.msra.mxu0 0.0
    %103 = vmatprep.subr.mxu0 0.0
    %104 = vmatpush1.msra.mxu0 0.0
    %105 = vmatprep.subr.mxu0 0.0
    %106 = vmatpush1.msra.mxu0 0.0
    %107 = vmatprep.subr.mxu0 0.0
    %108 = vmatpush1.msra.mxu0 0.0
    %109 = vmatprep.subr.mxu0 0.0
    %110 = vmatpush1.msra.mxu0 0.0
    %111 = vmatprep.subr.mxu0 0.0
    %112 = vmatpush1.msra.mxu0 0.0
    %113 = vmatprep.subr.mxu0 0.0
    %114 = vmatpush1.msra.mxu0 0.0
    %115 = vmatprep.subr.mxu0 0.0
    %116 = vmatpush1.msra.mxu0 0.0
    %117 = vmatprep.subr.mxu0 0.0
    %118 = vmatpush1.msra.mxu0 0.0
    %119 = vmatprep.subr.mxu0 0.0
    %120 = vmatpush1.msra.mxu0 0.0
    %121 = vmatprep.subr.mxu0 0.0
    %122 = vmatpush1.msra.mxu0 0.0
    %123 = vmatprep.subr.mxu0 0.0
    %124 = vmatpush1.msra.mxu0 0.0
    %125 = vmatprep.subr.mxu0 0.0
    %126 = vmatpush1.msra.mxu0 0.0
    %127 = vmatprep.subr.mxu0 0.0
    %128 = vmatpush1.msra.mxu0 0.0
    %129 = vmatprep.mubr.f32.mxu0 0.0
    %130 = vmatmul.mubr.f32.gmra.mrb[0].mxu0 %v41
    %v131 = vpop.f32.mrb[0].mxu0
    %v132 = vadd.f32 %v63, %v131
    %v133 = vpop.f32.mrb[0].mxu0
    %134 = vdwg.mxu0
    %135 = vst [vmem:[#allocation7] sm:$0xff] %v132
    // Predicated region
    $region22: #{_forward_impl.1} parent=1 // pred_check
      _
    $region23: #{_forward_impl.1} parent=1 // pred_check_branch
      %137 = sbr.rel (0) target = $region25
    $region24: #{_forward_impl.1} parent=1 // pred_region
      %s139 = ssub.s32 128, 128
      %140 = vsyncadd [#allocation4], %s139
      %s142 = sshll.u32 [#allocation7], 4
      %s143 = int_to_ptr.vmem [resolvable:$true] %s142
      %145 = dma.vmem_to_hbm [thread:$0]  %s143, 128, %s3, [#allocation4]
    $region25: #{_forward_impl.1} parent=1 // pred_fallthru
      _
    // Predicated region
    $region26: #{_forward_impl.1} parent=1 // pred_check
      _
    $region27: #{_forward_impl.1} parent=1 // pred_check_branch
      %147 = sbr.rel (0) target = $region29
    $region28: #{_forward_impl.1} parent=1 // pred_region
      %148 = dma.done [#allocation4], 128
    $region29: #{_forward_impl.1} parent=1 // pred_fallthru
      _
    %149 = vsyncpa [#allocation3], 1
    %150 = vsyncpa [#allocation6], 1
    %151 = vsyncpa [#allocation4], 1

</llo_original>
